<compile_context>
chip_gen: v6e
topology: v6e:2x2x1
jax: 0.10.0
libtpu: 0.0.40
codegen_flags: <defaults>
</compile_context>

<pallas_src>
import jax
import jax.numpy as jnp
from jax.experimental import pallas as pl
from jax.experimental.pallas import tpu as pltpu

NEG_SLOPE = 0.01  # nn.LeakyReLU() default negative_slope
LANE = 128
SUBLANE = 8
DEFAULT_TILE_M = 512  # rows per grid step; ~512*(64*2 + 128*4) B per buffer -> tiny vs VMEM


def _round_up(x, m):
    return (x + m - 1) // m * m


def _pred_head_kernel(x_ref, w1_ref, b1_ref, w2_ref, b2_ref, out_ref):
    """Conv1x1 -> Dropout(eval: identity) -> LeakyReLU -> Conv1x1, fused.

    x/w1/w2 are bf16 (MXU fast path); accumulation and biases are f32.
    """
    h = jnp.dot(x_ref[...], w1_ref[...], preferred_element_type=jnp.float32)
    h = h + b1_ref[...]
    # TODO(synk): nn.Dropout is identity at inference; torch training-mode RNG masking not reproduced.
    h = jnp.where(h > 0, h, NEG_SLOPE * h)  # LeakyReLU
    h = h.astype(w2_ref.dtype)              # bf16 into the second MXU pass
    out = jnp.dot(h, w2_ref[...], preferred_element_type=jnp.float32)
    out_ref[...] = out + b2_ref[...]


def _run_pred_head(x2d, w1_bf16, b1_f32, w2p_bf16, b2p_f32, cout,
                   *, tile_m=DEFAULT_TILE_M):
    """x2d: (N, Cin) f32.  w2p/b2p are already lane-padded (hid, Cp)/(1, Cp) with
    Cp a multiple of 128.  Returns (N, cout) f32."""
    n, cin = x2d.shape
    hid = w1_bf16.shape[1]
    cout_p = w2p_bf16.shape[1]

    # Row tiling: pad N up to a multiple of tile_m (and tile_m to a multiple of 8).
    tile_m = _round_up(min(tile_m, _round_up(n, SUBLANE)), SUBLANE)
    n_p = _round_up(n, tile_m)

    x_p = jnp.zeros((n_p, cin), jnp.bfloat16).at[:n].set(x2d.astype(jnp.bfloat16))

    out = pl.pallas_call(
        _pred_head_kernel,
        out_shape=jax.ShapeDtypeStruct((n_p, cout_p), jnp.float32),
        grid=(n_p // tile_m,),
        in_specs=[
            pl.BlockSpec((tile_m, cin), lambda i: (i, 0)),     # row tiles stream
            pl.BlockSpec((cin, hid), lambda i: (0, 0)),        # weights resident
            pl.BlockSpec((1, hid), lambda i: (0, 0)),
            pl.BlockSpec((hid, cout_p), lambda i: (0, 0)),
            pl.BlockSpec((1, cout_p), lambda i: (0, 0)),
        ],
        out_specs=pl.BlockSpec((tile_m, cout_p), lambda i: (i, 0)),  # lane-dense stores
        compiler_params=pltpu.CompilerParams(
            dimension_semantics=("parallel",)),  # megacore sharding on v7x
    )(x_p, w1_bf16, b1_f32, w2p_bf16, b2p_f32)
    return out[:n, :cout]


class PredictionNetworkPallas:
    def __init__(self, in_dim, hidden_dim=128, num_anchors=9, num_classes=20,
                 drop_ratio=0.3, key=None):
        assert num_classes != 0 and num_anchors != 0
        self.num_classes = num_classes
        self.num_anchors = num_anchors
        self.out_ch = 5 * num_anchors + num_classes
        self.out_ch_padded = _round_up(self.out_ch, LANE)

        if key is None:
            key = jax.random.PRNGKey(0)
        k1, k2, k3, k4 = jax.random.split(key, 4)
        # Deterministic synthetic params.  PyTorch conv weight shape is
        # (out, in, 1, 1); we store the transposed (in, out) matmul form.
        w1 = (jax.random.normal(k1, (in_dim, hidden_dim), jnp.float32)
              * (1.0 / jnp.sqrt(in_dim)))
        b1 = jax.random.normal(k2, (1, hidden_dim), jnp.float32) * 0.01
        w2 = (jax.random.normal(k3, (hidden_dim, self.out_ch), jnp.float32)
              * (1.0 / jnp.sqrt(hidden_dim)))
        b2 = jax.random.normal(k4, (1, self.out_ch), jnp.float32) * 0.01

        # Weights stored bf16 (MXU inputs); out-channel dim zero-padded to 128
        # lanes once here so every call writes a lane-dense slab.
        self.w1 = w1.astype(jnp.bfloat16)
        self.b1 = b1  # f32, added after the f32-accumulated matmul
        self.w2p = (jnp.zeros((hidden_dim, self.out_ch_padded), jnp.bfloat16)
                    .at[:, :self.out_ch].set(w2.astype(jnp.bfloat16)))
        self.b2p = (jnp.zeros((1, self.out_ch_padded), jnp.float32)
                    .at[:, :self.out_ch].set(b2))

    # --- glue helpers (match the torch reshape/gather semantics exactly) ---
    def _extract_anchor_data(self, anchor_data, anchor_idx):
        B, A, D, H, W = anchor_data.shape
        flat = jnp.transpose(anchor_data, (0, 1, 3, 4, 2)).reshape(-1, D)
        return flat[anchor_idx]

    def _extract_class_scores(self, all_scores, anchor_idx):
        B, C, H, W = all_scores.shape
        A = self.num_anchors
        s = jnp.transpose(all_scores, (0, 2, 3, 1)).reshape(B, 1, H, W, C)
        s = jnp.broadcast_to(s, (B, A, H, W, C)).reshape(B * A * H * W, C)
        return s[anchor_idx]

    def forward(self, features, pos_anchor_idx=None, neg_anchor_idx=None):
        B, Cin, H, W = features.shape
        A = self.num_anchors

        # NCHW -> (B*H*W, Cin) channels-last slab for the fused 1x1-conv kernel.
        # (Kept in the wrapper to preserve the NCHW interface of the PyTorch
        # module; a producer that already emits NHWC could feed the kernel
        # directly and skip both transposes.)
        x2d = jnp.transpose(features, (0, 2, 3, 1)).reshape(B * H * W, Cin)
        out2d = _run_pred_head(x2d, self.w1, self.b1, self.w2p, self.b2p,
                               self.out_ch)
        cout = out2d.shape[-1]
        # back to NCHW, matching pred_layer(features) of the torch module
        pred_outputs = jnp.transpose(out2d.reshape(B, H, W, cout), (0, 3, 1, 2))

        tmp = pred_outputs[:, :5 * A, :, :].reshape(B, A, 5, H, W)

        if pos_anchor_idx is not None:
            pos_anchors = self._extract_anchor_data(tmp, pos_anchor_idx)
            neg_anchors = self._extract_anchor_data(tmp, neg_anchor_idx)
            conf_tmp = jnp.stack([pos_anchors[:, 0], neg_anchors[:, 0]],
                                 axis=0).reshape(-1, 1)
            conf_scores = jax.nn.sigmoid(conf_tmp)
            offsets = pos_anchors[:, 1:]
            offsets = offsets.at[:, :2].set(
                jax.nn.sigmoid(offsets[:, :2]) - 0.5)
            class_scores = self._extract_class_scores(
                pred_outputs[:, 5 * A:, :, :], pos_anchor_idx)
        else:
            conf_scores = jax.nn.sigmoid(tmp[:, :, 0, :, :])
            # NOTE: intentionally replicates the PyTorch reference, which
            # applies sigmoid to channels 0..3 here (including the confidence
            # channel 0).  Do not "fix" this.
            offsets = jax.nn.sigmoid(tmp[:, :, :4, :, :]) - 0.5
            class_scores = pred_outputs[:, 5 * A:, :, :]
        return conf_scores, offsets, class_scores

    __call__ = forward


def _reference_pred_head(x2d, w1_bf16, b1_f32, w2p_bf16, b2p_f32, cout):
    """Plain-JAX reference using the same bf16-in / f32-accumulate numerics."""
    h = jnp.dot(x2d.astype(jnp.bfloat16), w1_bf16,
                preferred_element_type=jnp.float32) + b1_f32
    h = jnp.where(h > 0, h, NEG_SLOPE * h)
    out = jnp.dot(h.astype(jnp.bfloat16), w2p_bf16,
                  preferred_element_type=jnp.float32) + b2p_f32
    return out[:, :cout]


if __name__ == "__main__":
    key = jax.random.PRNGKey(0)
    k_feat, k_param = jax.random.split(key)

    B, in_dim, H, W = 2, 64, 7, 7
    hidden_dim, num_anchors, num_classes = 32, 9, 20

    net = PredictionNetworkPallas(in_dim, hidden_dim=hidden_dim,
                                  num_anchors=num_anchors,
                                  num_classes=num_classes, key=k_param)

    features = jax.random.normal(k_feat, (B, in_dim, H, W), jnp.float32)

    # --- inference path (all anchors) ---
    conf, offs, cls = net(features)
    jax.block_until_ready((conf, offs, cls))
    assert conf.shape == (B, num_anchors, H, W)
    assert offs.shape == (B, num_anchors, 4, H, W)
    assert cls.shape == (B, num_classes, H, W)

    # --- training path (gather positive / negative anchors) ---
    M = 5
    total = B * num_anchors * H * W
    pos_idx = jnp.array([3, 17, 101, 555, 880], dtype=jnp.int32) % total
    neg_idx = jnp.array([0, 42, 200, 700, 881], dtype=jnp.int32) % total
    conf_t, offs_t, cls_t = net(features, pos_idx, neg_idx)
    jax.block_until_ready((conf_t, offs_t, cls_t))
    assert conf_t.shape == (2 * M, 1)
    assert offs_t.shape == (M, 4)
    assert cls_t.shape == (M, num_classes)

    # --- sanity check of the Pallas kernel vs a plain-JAX reference ---
    x2d = jnp.transpose(features, (0, 2, 3, 1)).reshape(B * H * W, in_dim)
    got = _run_pred_head(x2d, net.w1, net.b1, net.w2p, net.b2p, net.out_ch)
    want = _reference_pred_head(x2d, net.w1, net.b1, net.w2p, net.b2p,
                                net.out_ch)
    jax.block_until_ready((got, want))
    assert got.shape == want.shape
    assert jnp.allclose(got, want, atol=1e-2, rtol=1e-2)

    print("KERNEL_OK")
</pallas_src>

<mosaic_0001>
module attributes {stable_mosaic.version = 11 : i64} {
  func.func @_pred_head_kernel(%arg0: i32, %arg1: memref<104x64xbf16, #tpu.memory_space<vmem>>, %arg2: memref<64x32xbf16, #tpu.memory_space<vmem>>, %arg3: memref<1x32xf32, #tpu.memory_space<vmem>>, %arg4: memref<32x128xbf16, #tpu.memory_space<vmem>>, %arg5: memref<1x128xf32, #tpu.memory_space<vmem>>, %arg6: memref<104x128xf32, #tpu.memory_space<vmem>>) attributes {dimension_semantics = [#tpu.dimension_semantics<parallel>], iteration_bounds = array<i64: 1>, scalar_prefetch = 0 : i64, scratch_operands = 0 : i64, tpu.core_type = #tpu.core_type<tc>, window_params = [{transform_indices = @transform_0, window_bounds = array<i64: 104, 64>}, {pipeline_mode = #tpu.pipeline_mode<synchronous>, transform_indices = @transform_1, window_bounds = array<i64: 64, 32>}, {pipeline_mode = #tpu.pipeline_mode<synchronous>, transform_indices = @transform_2, window_bounds = array<i64: 1, 32>}, {pipeline_mode = #tpu.pipeline_mode<synchronous>, transform_indices = @transform_3, window_bounds = array<i64: 32, 128>}, {pipeline_mode = #tpu.pipeline_mode<synchronous>, transform_indices = @transform_4, window_bounds = array<i64: 1, 128>}, {transform_indices = @transform_5, window_bounds = array<i64: 104, 128>}]} {
    %c0 = arith.constant 0 : index
    %c0_0 = arith.constant 0 : index
    %0 = vector.load %arg1[%c0, %c0_0] : memref<104x64xbf16, #tpu.memory_space<vmem>>, vector<104x64xbf16>
    %c0_1 = arith.constant 0 : index
    %c0_2 = arith.constant 0 : index
    %1 = vector.load %arg2[%c0_1, %c0_2] : memref<64x32xbf16, #tpu.memory_space<vmem>>, vector<64x32xbf16>
    %cst = arith.constant dense<0.000000e+00> : vector<104x32xf32>
    %2 = tpu.matmul %0, %1, %cst {dimension_numbers = #tpu.dot_dimension_numbers<[1], [0], [0], [1], [0, 0, 1, 1], [], []>} : vector<104x64xbf16>, vector<64x32xbf16>, vector<104x32xf32> -> vector<104x32xf32>
    %c0_3 = arith.constant 0 : index
    %c0_4 = arith.constant 0 : index
    %3 = vector.load %arg3[%c0_3, %c0_4] : memref<1x32xf32, #tpu.memory_space<vmem>>, vector<1x32xf32>
    %4 = vector.broadcast %3 : vector<1x32xf32> to vector<104x32xf32>
    %5 = arith.addf %2, %4 : vector<104x32xf32>
    %cst_5 = arith.constant 0.000000e+00 : f32
    %6 = vector.broadcast %cst_5 : f32 to vector<104x32xf32>
    %7 = arith.cmpf ogt, %5, %6 : vector<104x32xf32>
    %cst_6 = arith.constant 0.00999999977 : f32
    %8 = vector.broadcast %cst_6 : f32 to vector<104x32xf32>
    %9 = arith.mulf %8, %5 : vector<104x32xf32>
    %10 = arith.select %7, %5, %9 : vector<104x32xi1>, vector<104x32xf32>
    %11 = arith.truncf %10 : vector<104x32xf32> to vector<104x32xbf16>
    %c0_7 = arith.constant 0 : index
    %c0_8 = arith.constant 0 : index
    %12 = vector.load %arg4[%c0_7, %c0_8] : memref<32x128xbf16, #tpu.memory_space<vmem>>, vector<32x128xbf16>
    %cst_9 = arith.constant dense<0.000000e+00> : vector<104x128xf32>
    %13 = tpu.matmul %11, %12, %cst_9 {dimension_numbers = #tpu.dot_dimension_numbers<[1], [0], [0], [1], [0, 0, 1, 1], [], []>} : vector<104x32xbf16>, vector<32x128xbf16>, vector<104x128xf32> -> vector<104x128xf32>
    %c0_10 = arith.constant 0 : index
    %c0_11 = arith.constant 0 : index
    %14 = vector.load %arg5[%c0_10, %c0_11] : memref<1x128xf32, #tpu.memory_space<vmem>>, vector<1x128xf32>
    %15 = vector.broadcast %14 : vector<1x128xf32> to vector<104x128xf32>
    %16 = arith.addf %13, %15 : vector<104x128xf32>
    %c0_12 = arith.constant 0 : index
    %c0_13 = arith.constant 0 : index
    %17 = vector.load %arg6[%c0_12, %c0_13] : memref<104x128xf32, #tpu.memory_space<vmem>>, vector<104x128xf32>
    tpu.vector_store %arg6[%c0_12, %c0_13], %16 {strides = array<i32>} : memref<104x128xf32, #tpu.memory_space<vmem>>, vector<104x128xf32>,
    return
  }
  func.func @transform_0(%arg0: i32) -> (i32, i32) {
    %c0_i32 = arith.constant 0 : i32
    %c0_i32_0 = arith.constant 0 : i32
    return %arg0, %c0_i32 : i32, i32
  }
  func.func @transform_1(%arg0: i32) -> (i32, i32) {
    %c0_i32 = arith.constant 0 : i32
    %c0_i32_0 = arith.constant 0 : i32
    %c0_i32_1 = arith.constant 0 : i32
    return %c0_i32, %c0_i32_0 : i32, i32
  }
  func.func @transform_2(%arg0: i32) -> (i32, i32) {
    %c0_i32 = arith.constant 0 : i32
    %c0_i32_0 = arith.constant 0 : i32
    %c0_i32_1 = arith.constant 0 : i32
    return %c0_i32, %c0_i32_0 : i32, i32
  }
  func.func @transform_3(%arg0: i32) -> (i32, i32) {
    %c0_i32 = arith.constant 0 : i32
    %c0_i32_0 = arith.constant 0 : i32
    %c0_i32_1 = arith.constant 0 : i32
    return %c0_i32, %c0_i32_0 : i32, i32
  }
  func.func @transform_4(%arg0: i32) -> (i32, i32) {
    %c0_i32 = arith.constant 0 : i32
    %c0_i32_0 = arith.constant 0 : i32
    %c0_i32_1 = arith.constant 0 : i32
    return %c0_i32, %c0_i32_0 : i32, i32
  }
  func.func @transform_5(%arg0: i32) -> (i32, i32) {
    %c0_i32 = arith.constant 0 : i32
    %c0_i32_0 = arith.constant 0 : i32
    return %arg0, %c0_i32 : i32, i32
  }
}

</mosaic_0001>

<llo_original>
// kernel: tpu_custom_call.1
$region0: #{tpu_custom_call.1}
  #allocation0 [shape = 'u32[]', space=smem, size = 0x4, offset = 0x4, fixed_abs, tag = 'smem constant byte address 0x4 - core index']
  #allocation1 [shape = 'u32[144,128]{1,0:T(1,128)}', space=vmem, size = 0x12000, scoped, tag = 'internal scratch']
  %s0 = inlined_call_operand.vmem [shape: bf16[104,64], index: 0, kind: input, shape index: {}]
  %s1 = inlined_call_operand.vmem [shape: bf16[64,32], index: 1, kind: input, shape index: {}]
  %s2 = inlined_call_operand.vmem [shape: f32[1,32], index: 2, kind: input, shape index: {}]
  %s3 = inlined_call_operand.vmem [shape: bf16[32,128], index: 3, kind: input, shape index: {}]
  %s4 = inlined_call_operand.vmem [shape: f32[1,128], index: 4, kind: input, shape index: {}]
  %s5 = inlined_call_operand.hbm [shape: f32[104,128], index: 5, kind: output, shape index: {}]
  %s6 = sld [smem:[#allocation0]]
  $region30: #{tpu_custom_call.1} parent=0
    _
  %s8 = ssub.s32 1, %s6
  %s9 = scalar_select 0, %s8, %s6
  $region1: #{tpu_custom_call.1} parent=0
    #allocation2 [shape = 'u8[53248]{0}', space=vmem, size = 0xd000, scoped, tag = 'output window, operand 0, single buffered']
    #allocation3 [shape = 's32[1]{0}', space=sflag, size = 0x4, scoped, tag = 'scoped memory for tpu_custom_call.1']
    %10 = vsyncpa [#allocation3], 0
    // Predicated region
    $region2: #{tpu_custom_call.1} parent=1 // pred_check
      _
    $region3: #{tpu_custom_call.1} parent=1 // pred_check_branch
      %12 = sbr.rel (0) target = $region5
    $region4: #{tpu_custom_call.1} parent=1 // pred_region
      _
    $region5: #{tpu_custom_call.1} parent=1 // pred_fallthru
      _
    // Predicated region
    $region6: #{tpu_custom_call.1} parent=1 // pred_check
      _
    $region7: #{tpu_custom_call.1} parent=1 // pred_check_branch
      %14 = sbr.rel (0) target = $region9
    $region8: #{tpu_custom_call.1} parent=1 // pred_region
      _
    $region9: #{tpu_custom_call.1} parent=1 // pred_fallthru
      _
    // Predicated region
    $region10: #{tpu_custom_call.1} parent=1 // pred_check
      _
    $region11: #{tpu_custom_call.1} parent=1 // pred_check_branch
      %16 = sbr.rel (0) target = $region13
    $region12: #{tpu_custom_call.1} parent=1 // pred_region
      _
    $region13: #{tpu_custom_call.1} parent=1 // pred_fallthru
      _
    // Predicated region
    $region14: #{tpu_custom_call.1} parent=1 // pred_check
      _
    $region15: #{tpu_custom_call.1} parent=1 // pred_check_branch
      %18 = sbr.rel (0) target = $region17
    $region16: #{tpu_custom_call.1} parent=1 // pred_region
      _
    $region17: #{tpu_custom_call.1} parent=1 // pred_fallthru
      _
    // Predicated region
    $region18: #{tpu_custom_call.1} parent=1 // pred_check
      _
    $region19: #{tpu_custom_call.1} parent=1 // pred_check_branch
      %20 = sbr.rel (0) target = $region21
    $region20: #{tpu_custom_call.1} parent=1 // pred_region
      _
    $region21: #{tpu_custom_call.1} parent=1 // pred_fallthru
      _
    %v22 = vld [vmem:[%s0] sm:$0xf]
    %v23 = vld [vmem:[%s0 + $0x4] sm:$0xf]
    %v24 = vld [vmem:[%s0 + $0x8] sm:$0xf]
    %v25 = vld [vmem:[%s0 + $0xc] sm:$0xf]
    %v26 = vld [vmem:[%s0 + $0x10] sm:$0xf]
    %v27 = vld [vmem:[%s0 + $0x14] sm:$0xf]
    %v28 = vld [vmem:[%s0 + $0x18] sm:$0xf]
    %v29 = vld [vmem:[%s0 + $0x1c] sm:$0xf]
    %v30 = vld [vmem:[%s0 + $0x20] sm:$0xf]
    %v31 = vld [vmem:[%s0 + $0x24] sm:$0xf]
    %v32 = vld [vmem:[%s0 + $0x28] sm:$0xf]
    %v33 = vld [vmem:[%s0 + $0x2c] sm:$0xf]
    %v34 = vld [vmem:[%s0 + $0x30] sm:$0xf]
    %v35 = vld [vmem:[%s1] sm:$0xf]
    %v36 = vld [vmem:[%s1 + $0x4] sm:$0xf]
    %v37 = vld [vmem:[%s1 + $0x8] sm:$0xf]
    %v38 = vld [vmem:[%s1 + $0xc] sm:$0xf]
    %v39 = vld [vmem:[%s1 + $0x10] sm:$0xf]
    %v40 = vld [vmem:[%s1 + $0x14] sm:$0xf]
    %v41 = vld [vmem:[%s1 + $0x18] sm:$0xf]
    %v42 = vld [vmem:[%s1 + $0x1c] sm:$0xf]
    %v43 = vld [vmem:[%s2] sm:$0x1]
    %v45 = vlaneseq
    %v46 = vshrl.u32 %v45, 7
    %v47 = vsub.s32 0, %v46
    %v48 = vrot.slane %v43, %v47
    %v63 = vunpack.c.l.b16 %v22
    %v64 = vunpack.c.l.b16 %v23
    %v65 = vunpack.c.l.b16 %v24
    %v66 = vunpack.c.l.b16 %v25
    %v67 = vunpack.c.l.b16 %v26
    %v68 = vunpack.c.l.b16 %v27
    %v69 = vunpack.c.l.b16 %v28
    %v70 = vunpack.c.l.b16 %v29
    %v71 = vunpack.c.l.b16 %v30
    %v72 = vunpack.c.l.b16 %v31
    %v73 = vunpack.c.l.b16 %v32
    %v74 = vunpack.c.l.b16 %v33
    %v75 = vunpack.c.l.b16 %v34
    %v76 = vpack.c.b16 %v64, %v63
    %v77 = vpack.c.b16 %v66, %v65
    %v78 = vpack.c.b16 %v68, %v67
    %v79 = vpack.c.b16 %v70, %v69
    %v80 = vpack.c.b16 %v72, %v71
    %v81 = vpack.c.b16 %v74, %v73
    %v82 = vpack.c.b16 %v75, %v75
    %v91 = vunpack.c.l.b16 %v35
    %v92 = vunpack.c.l.b16 %v36
    %v93 = vunpack.c.l.b16 %v37
    %v94 = vunpack.c.l.b16 %v38
    %v95 = vunpack.c.l.b16 %v39
    %v96 = vunpack.c.l.b16 %v40
    %v97 = vunpack.c.l.b16 %v41
    %v98 = vunpack.c.l.b16 %v42
    %v99 = vpack.c.b16 %v92, %v91
    %v100 = vpack.c.b16 %v94, %v93
    %v101 = vpack.c.b16 %v96, %v95
    %v102 = vpack.c.b16 %v98, %v97
    %vm107 = vcmask 523264
    %v109 = vsel %vm107, %v76, 0
    %v112 = vsel %vm107, %v77, 0
    %v115 = vsel %vm107, %v78, 0
    %v118 = vsel %vm107, %v79, 0
    %v121 = vsel %vm107, %v80, 0
    %v124 = vsel %vm107, %v81, 0
    %v127 = vsel %vm107, %v82, 0
    %129 = vmatprep.subr.bf16.mxu0 0
    %130 = vmatpush1.bf16.msra.mxu0 0
    %131 = vmatprep.subr.bf16.mxu0 0
    %132 = vmatpush1.bf16.msra.mxu0 0
    %133 = vmatprep.subr.bf16.mxu0 0
    %134 = vmatpush1.bf16.msra.mxu0 0
    %135 = vmatprep.subr.bf16.mxu0 0
    %136 = vmatpush1.bf16.msra.mxu0 0
    %137 = vmatprep.subr.bf16.mxu0 0
    %138 = vmatpush1.bf16.msra.mxu0 %v102
    %139 = vmatprep.subr.bf16.mxu0 0
    %140 = vmatpush1.bf16.msra.mxu0 %v101
    %141 = vmatprep.subr.bf16.mxu0 0
    %142 = vmatpush1.bf16.msra.mxu0 %v100
    %143 = vmatprep.subr.bf16.mxu0 0
    %144 = vmatpush1.bf16.msra.mxu0 %v99
    %145 = vmatprep.subr.bf16.mxu0 0
    %146 = vmatpush2.bf16.msra.mxu0 0
    %147 = vmatprep.subr.bf16.mxu0 0
    %148 = vmatpush2.bf16.msra.mxu0 0
    %149 = vmatprep.subr.bf16.mxu0 0
    %150 = vmatpush2.bf16.msra.mxu0 0
    %151 = vmatprep.subr.bf16.mxu0 0
    %152 = vmatpush2.bf16.msra.mxu0 0
    %153 = vmatprep.subr.bf16.mxu0 0
    %154 = vmatpush2.bf16.msra.mxu0 0
    %155 = vmatprep.subr.bf16.mxu0 0
    %156 = vmatpush2.bf16.msra.mxu0 0
    %157 = vmatprep.subr.bf16.mxu0 0
    %158 = vmatpush2.bf16.msra.mxu0 0
    %159 = vmatprep.subr.bf16.mxu0 0
    %160 = vmatpush2.bf16.msra.mxu0 0
    %161 = vmatprep.mubr.bf16.mxu0 0
    %162 = vmatmul.mubr.bf16.gmra.mxu0 %v109
    %v163 = vpop.f32.mrf.mxu0
    %v164 = vadd.f32 %v48, %v163
    %v165 = vpop.f32.mrf.mxu0
    %v166 = vpop.f32.mrf.mxu0
    %v167 = vadd.f32 %v48, %v166
    %v168 = vpop.f32.mrf.mxu0
    %169 = vmatprep.mubr.bf16.mxu0 0
    %170 = vmatmul.mubr.bf16.gmra.mxu0 %v112
    %v171 = vpop.f32.mrf.mxu0
    %v172 = vadd.f32 %v48, %v171
    %v173 = vpop.f32.mrf.mxu0
    %v174 = vpop.f32.mrf.mxu0
    %v175 = vadd.f32 %v48, %v174
    %v176 = vpop.f32.mrf.mxu0
    %177 = vmatprep.mubr.bf16.mxu0 0
    %178 = vmatmul.mubr.bf16.gmra.mxu0 %v115
    %v179 = vpop.f32.mrf.mxu0
    %v180 = vadd.f32 %v48, %v179
    %v181 = vpop.f32.mrf.mxu0
    %v182 = vpop.f32.mrf.mxu0
    %v183 = vadd.f32 %v48, %v182
    %v184 = vpop.f32.mrf.mxu0
    %185 = vmatprep.mubr.bf16.mxu0 0
    %186 = vmatmul.mubr.bf16.gmra.mxu0 %v118
    %v187 = vpop.f32.mrf.mxu0
    %v188 = vadd.f32 %v48, %v187
    %v189 = vpop.f32.mrf.mxu0
    %v190 = vpop.f32.mrf.mxu0
    %v191 = vadd.f32 %v48, %v190
    %v192 = vpop.f32.mrf.mxu0
    %193 = vmatprep.mubr.bf16.mxu0 0
    %194 = vmatmul.mubr.bf16.gmra.mxu0 %v121
    %v195 = vpop.f32.mrf.mxu0
    %v196 = vadd.f32 %v48, %v195
    %v197 = vpop.f32.mrf.mxu0
    %v198 = vpop.f32.mrf.mxu0
    %v199 = vadd.f32 %v48, %v198
    %v200 = vpop.f32.mrf.mxu0
    %201 = vmatprep.mubr.bf16.mxu0 0
    %202 = vmatmul.mubr.bf16.gmra.mxu0 %v124
    %v203 = vpop.f32.mrf.mxu0
    %v204 = vadd.f32 %v48, %v203
    %v205 = vpop.f32.mrf.mxu0
    %v206 = vpop.f32.mrf.mxu0
    %v207 = vadd.f32 %v48, %v206
    %v208 = vpop.f32.mrf.mxu0
    %209 = vmatprep.mubr.bf16.mxu0 0
    %210 = vmatmul.mubr.bf16.gmra.mxu0 %v127
    %v211 = vpop.f32.mrf.mxu0
    %v212 = vadd.f32 %v48, %v211
    %v213 = vpop.f32.mrf.mxu0
    %v214 = vpop.f32.mrf.mxu0
    %v215 = vpop.f32.mrf.mxu0
    %216 = vdwg.mxu0
    %vm217 = vcmp.gt.f32.partialorder %v164, 0.0
    %vm218 = vcmp.gt.f32.partialorder %v167, 0.0
    %vm219 = vcmp.gt.f32.partialorder %v172, 0.0
    %vm220 = vcmp.gt.f32.partialorder %v175, 0.0
    %vm221 = vcmp.gt.f32.partialorder %v180, 0.0
    %vm222 = vcmp.gt.f32.partialorder %v183, 0.0
    %vm223 = vcmp.gt.f32.partialorder %v188, 0.0
    %vm224 = vcmp.gt.f32.partialorder %v191, 0.0
    %vm225 = vcmp.gt.f32.partialorder %v196, 0.0
    %vm226 = vcmp.gt.f32.partialorder %v199, 0.0
    %vm227 = vcmp.gt.f32.partialorder %v204, 0.0
    %vm228 = vcmp.gt.f32.partialorder %v207, 0.0
    %vm229 = vcmp.gt.f32.partialorder %v212, 0.0
    %v230 = vmul.f32 %v164, 0.01
    %v231 = vmul.f32 %v167, 0.01
    %v232 = vmul.f32 %v172, 0.01
    %v233 = vmul.f32 %v175, 0.01
    %v234 = vmul.f32 %v180, 0.01
    %v235 = vmul.f32 %v183, 0.01
    %v236 = vmul.f32 %v188, 0.01
    %v237 = vmul.f32 %v191, 0.01
    %v238 = vmul.f32 %v196, 0.01
    %v239 = vmul.f32 %v199, 0.01
    %v240 = vmul.f32 %v204, 0.01
    %v241 = vmul.f32 %v207, 0.01
    %v242 = vmul.f32 %v212, 0.01
    %v243 = vsel %vm217, %v164, %v230
    %v244 = vsel %vm218, %v167, %v231
    %v245 = vsel %vm219, %v172, %v232
    %v246 = vsel %vm220, %v175, %v233
    %v247 = vsel %vm221, %v180, %v234
    %v248 = vsel %vm222, %v183, %v235
    %v249 = vsel %vm223, %v188, %v236
    %v250 = vsel %vm224, %v191, %v237
    %v251 = vsel %vm225, %v196, %v238
    %v252 = vsel %vm226, %v199, %v239
    %v253 = vsel %vm227, %v204, %v240
    %v254 = vsel %vm228, %v207, %v241
    %v255 = vsel %vm229, %v212, %v242
    %v256 = vpack.c.bf16 %v244, %v243
    %v257 = vpack.c.bf16 %v246, %v245
    %v258 = vpack.c.bf16 %v248, %v247
    %v259 = vpack.c.bf16 %v250, %v249
    %v260 = vpack.c.bf16 %v252, %v251
    %v261 = vpack.c.bf16 %v254, %v253
    %v262 = vpack.c.bf16 %v255, %v255
    %v263 = vld [vmem:[%s3] sm:$0xf]
    %v264 = vld [vmem:[%s3 + $0x4] sm:$0xf]
    %v265 = vld [vmem:[%s3 + $0x8] sm:$0xf]
    %v266 = vld [vmem:[%s3 + $0xc] sm:$0xf]
    %v267 = vld [vmem:[%s4] sm:$0x1]
    %v269 = vlaneseq
    %v270 = vshrl.u32 %v269, 7
    %v271 = vsub.s32 0, %v270
    %v272 = vrot.slane %v267, %v271
    %v278 = vunpack.c.l.b16 %v263
    %v279 = vunpack.c.l.b16 %v264
    %v280 = vunpack.c.l.b16 %v265
    %v281 = vunpack.c.l.b16 %v266
    %v282 = vpack.c.b16 %v279, %v278
    %v283 = vpack.c.b16 %v281, %v280
    %vm286 = vcmask 261120
    %v288 = vsel %vm286, %v256, 0
    %v291 = vsel %vm286, %v257, 0
    %v294 = vsel %vm286, %v258, 0
    %v297 = vsel %vm286, %v259, 0
    %v300 = vsel %vm286, %v260, 0
    %v303 = vsel %vm286, %v261, 0
    %v306 = vsel %vm286, %v262, 0
    %308 = vmatprep.subr.bf16.mxu0 0
    %309 = vmatpush1.bf16.msra.mxu0 0
    %310 = vmatprep.subr.bf16.mxu0 0
    %311 = vmatpush1.bf16.msra.mxu0 0
    %312 = vmatprep.subr.bf16.mxu0 0
    %313 = vmatpush1.bf16.msra.mxu0 0
    %314 = vmatprep.subr.bf16.mxu0 0
    %315 = vmatpush1.bf16.msra.mxu0 0
    %316 = vmatprep.subr.bf16.mxu0 0
    %317 = vmatpush1.bf16.msra.mxu0 0
    %318 = vmatprep.subr.bf16.mxu0 0
    %319 = vmatpush1.bf16.msra.mxu0 0
    %320 = vmatprep.subr.bf16.mxu0 0
    %321 = vmatpush1.bf16.msra.mxu0 %v283
    %322 = vmatprep.subr.bf16.mxu0 0
    %323 = vmatpush1.bf16.msra.mxu0 %v282
    %324 = vmatprep.subr.bf16.mxu0 0
    %325 = vmatpush2.bf16.msra.mxu0 0
    %326 = vmatprep.subr.bf16.mxu0 0
    %327 = vmatpush2.bf16.msra.mxu0 0
    %328 = vmatprep.subr.bf16.mxu0 0
    %329 = vmatpush2.bf16.msra.mxu0 0
    %330 = vmatprep.subr.bf16.mxu0 0
    %331 = vmatpush2.bf16.msra.mxu0 0
    %332 = vmatprep.subr.bf16.mxu0 0
    %333 = vmatpush2.bf16.msra.mxu0 0
    %334 = vmatprep.subr.bf16.mxu0 0
    %335 = vmatpush2.bf16.msra.mxu0 0
    %336 = vmatprep.subr.bf16.mxu0 0
    %337 = vmatpush2.bf16.msra.mxu0 0
    %338 = vmatprep.subr.bf16.mxu0 0
    %339 = vmatpush2.bf16.msra.mxu0 0
    %340 = vmatprep.mubr.bf16.mxu0 0
    %341 = vmatmul.mubr.bf16.gmra.mxu0 %v288
    %v342 = vpop.f32.mrf.mxu0
    %v343 = vadd.f32 %v272, %v342
    %v344 = vpop.f32.mrf.mxu0
    %v345 = vpop.f32.mrf.mxu0
    %v346 = vadd.f32 %v272, %v345
    %v347 = vpop.f32.mrf.mxu0
    %348 = vmatprep.mubr.bf16.mxu0 0
    %349 = vmatmul.mubr.bf16.gmra.mxu0 %v291
    %v350 = vpop.f32.mrf.mxu0
    %v351 = vadd.f32 %v272, %v350
    %v352 = vpop.f32.mrf.mxu0
    %v353 = vpop.f32.mrf.mxu0
    %v354 = vadd.f32 %v272, %v353
    %v355 = vpop.f32.mrf.mxu0
    %356 = vmatprep.mubr.bf16.mxu0 0
    %357 = vmatmul.mubr.bf16.gmra.mxu0 %v294
    %v358 = vpop.f32.mrf.mxu0
    %v359 = vadd.f32 %v272, %v358
    %v360 = vpop.f32.mrf.mxu0
    %v361 = vpop.f32.mrf.mxu0
    %v362 = vadd.f32 %v272, %v361
    %v363 = vpop.f32.mrf.mxu0
    %364 = vmatprep.mubr.bf16.mxu0 0
    %365 = vmatmul.mubr.bf16.gmra.mxu0 %v297
    %v366 = vpop.f32.mrf.mxu0
    %v367 = vadd.f32 %v272, %v366
    %v368 = vpop.f32.mrf.mxu0
    %v369 = vpop.f32.mrf.mxu0
    %v370 = vadd.f32 %v272, %v369
    %v371 = vpop.f32.mrf.mxu0
    %372 = vmatprep.mubr.bf16.mxu0 0
    %373 = vmatmul.mubr.bf16.gmra.mxu0 %v300
    %v374 = vpop.f32.mrf.mxu0
    %v375 = vadd.f32 %v272, %v374
    %v376 = vpop.f32.mrf.mxu0
    %v377 = vpop.f32.mrf.mxu0
    %v378 = vadd.f32 %v272, %v377
    %v379 = vpop.f32.mrf.mxu0
    %380 = vmatprep.mubr.bf16.mxu0 0
    %381 = vmatmul.mubr.bf16.gmra.mxu0 %v303
    %v382 = vpop.f32.mrf.mxu0
    %v383 = vadd.f32 %v272, %v382
    %v384 = vpop.f32.mrf.mxu0
    %v385 = vpop.f32.mrf.mxu0
    %v386 = vadd.f32 %v272, %v385
    %v387 = vpop.f32.mrf.mxu0
    %388 = vmatprep.mubr.bf16.mxu0 0
    %389 = vmatmul.mubr.bf16.gmra.mxu0 %v306
    %v390 = vpop.f32.mrf.mxu0
    %v391 = vadd.f32 %v272, %v390
    %v392 = vpop.f32.mrf.mxu0
    %v393 = vpop.f32.mrf.mxu0
    %v394 = vpop.f32.mrf.mxu0
    %395 = vdwg.mxu0
    %396 = vst [vmem:[#allocation2] sm:$0xff] %v343
    %397 = vst [vmem:[#allocation2 + $0x8] sm:$0xff] %v346
    %398 = vst [vmem:[#allocation2 + $0x10] sm:$0xff] %v351
    %399 = vst [vmem:[#allocation2 + $0x18] sm:$0xff] %v354
    %400 = vst [vmem:[#allocation2 + $0x20] sm:$0xff] %v359
    %401 = vst [vmem:[#allocation2 + $0x28] sm:$0xff] %v362
    %402 = vst [vmem:[#allocation2 + $0x30] sm:$0xff] %v367
    %403 = vst [vmem:[#allocation2 + $0x38] sm:$0xff] %v370
    %404 = vst [vmem:[#allocation2 + $0x40] sm:$0xff] %v375
    %405 = vst [vmem:[#allocation2 + $0x48] sm:$0xff] %v378
    %406 = vst [vmem:[#allocation2 + $0x50] sm:$0xff] %v383
    %407 = vst [vmem:[#allocation2 + $0x58] sm:$0xff] %v386
    %408 = vst [vmem:[#allocation2 + $0x60] sm:$0xff] %v391
    // Predicated region
    $region22: #{tpu_custom_call.1} parent=1 // pred_check
      _
    $region23: #{tpu_custom_call.1} parent=1 // pred_check_branch
      %410 = sbr.rel (0) target = $region25
    $region24: #{tpu_custom_call.1} parent=1 // pred_region
      %s412 = ssub.s32 1664, 1664
      %413 = vsyncadd [#allocation3], %s412
      %s414 = sshll.u32 [#allocation2], 4
      %s415 = int_to_ptr.vmem [resolvable:$true] %s414
      %420 = dma.vmem_to_hbm [thread:$0]  %s415, 1664, %s5, [#allocation3], 128, 128, 8
    $region25: #{tpu_custom_call.1} parent=1 // pred_fallthru
      _
    // Predicated region
    $region26: #{tpu_custom_call.1} parent=1 // pred_check
      _
    $region27: #{tpu_custom_call.1} parent=1 // pred_check_branch
      %422 = sbr.rel (0) target = $region29
    $region28: #{tpu_custom_call.1} parent=1 // pred_region
      %423 = dma.done [#allocation3], 1664
    $region29: #{tpu_custom_call.1} parent=1 // pred_fallthru
      _
    %424 = vsyncpa [#allocation3], 1

</llo_original>
